<compile_context>
chip_gen: v7x
topology: tpu7x:2x2x1
jax: 0.10.0
libtpu: 0.0.40
codegen_flags: <defaults>
</compile_context>

<pallas_src>
import math

import jax
import jax.numpy as jnp
from jax.experimental import pallas as pl
from jax.experimental.pallas import tpu as pltpu


def _make_focal_dice_kernel(ts, gamma, binary_mask):
    gamma = float(gamma)                      # Python float -> baked-in literal
    use_int_pow = binary_mask and gamma.is_integer() and 0.0 <= gamma <= 16.0

    def kernel(x_ref, m_ref, part_ref):
        g = pl.program_id(2)

        @pl.when(g == 0)
        def _():
            part_ref[...] = jnp.zeros_like(part_ref)

        # (1, ts, 128) lane-dense tiles; upcast so bf16 / int / bool inputs also
        # work (v5e has no bf16 VPU/EUP).
        x = x_ref[...].astype(jnp.float32)
        m = m_ref[...].astype(jnp.float32)

        # Single stable log_sigmoid(x): everything else is derived from it.
        ls = jnp.minimum(x, 0.0) - jnp.log1p(jnp.exp(-jnp.abs(x)))
        p = jnp.exp(ls)                       # sigmoid(x)
        bce = x * (1.0 - m) - ls              # == BCE-with-logits(x, m)

        if binary_mask:
            # exp(log_sigmoid(-x*(2m-1))) == m + p - 2mp  for m in {0,1}.
            if use_int_pow:
                w = m + p - 2.0 * m * p
                if int(gamma) == 0:
                    weight = jnp.ones_like(w)
                else:
                    weight = w
                    for _ in range(int(gamma) - 1):   # pure VPU muls, no EUP
                        weight = weight * w
            else:
                weight = jnp.exp(gamma * (ls - x * m))
            den2_el = m                        # m*m == m for binary masks
        else:
            # General (soft-mask) stable form.
            z = x * (1.0 - 2.0 * m)
            lsz = jnp.minimum(z, 0.0) - jnp.log1p(jnp.exp(-jnp.abs(z)))
            weight = jnp.exp(gamma * lsz)
            den2_el = m * m

        focal = weight * bce

        # Sublane-group partial reductions: (1, ts, 128) -> (8, 128) with pure
        # VPU vreg adds (no cross-lane XLU trees, no iota/where scatter).
        def red(a):
            return jnp.sum(a.reshape(ts // 8, 8, 128), axis=0)

        contrib = jnp.concatenate(
            [red(p * m), red(p * p), red(den2_el), red(focal)], axis=0)  # (32,128)
        part_ref[...] = part_ref[...] + contrib[None, None]

    return kernel


def focal_dice_loss(output, mask, *, gamma, alpha, binary_mask=True, ts_max=4096):
    """FocalDice loss = alpha * FocalLoss(gamma) - log(1 - DICELoss).

    output: (N, 1, H, W) logits; mask: (N, H, W) (or (N, 1, H, W)) targets.
    The mask may be passed in a narrow dtype (bool / int8 / bf16) - it is
    upcast in-kernel, halving its HBM traffic.  binary_mask=True enables the
    algebraic simplifications that are only valid for masks in {0, 1}; pass
    False for soft masks.
    """
    gamma = float(gamma)
    alpha = float(alpha)
    assert ts_max % 8 == 0 and ts_max > 0

    x = jnp.squeeze(output, axis=1)                      # (N, H, W)
    m = mask
    if m.ndim == x.ndim + 1 and m.shape[1] == 1:
        m = jnp.squeeze(m, axis=1)
    assert x.shape == m.shape, (x.shape, m.shape)
    N, H, W = x.shape
    HW = H * W

    # Lane-dense layout: flatten spatial -> (N, Sp, 128), Sp a multiple of 8.
    S = pl.cdiv(HW, 128)
    S8 = ((S + 7) // 8) * 8
    # 2-way parallel spatial split keeps v7x's 2nd TensorCore busy when N == 1.
    nsplit = 2 if N == 1 else 1
    G = max(pl.cdiv(S8, ts_max), nsplit)
    G = ((G + nsplit - 1) // nsplit) * nsplit            # divisible by nsplit
    TS = ((pl.cdiv(S8, G) + 7) // 8) * 8                 # <= ts_max, multiple of 8
    Sp = G * TS
    Gs = G // nsplit
    HWp = Sp * 128
    pad = HWp - HW

    def prep(a):
        a = a.reshape(N, HW)
        if pad:
            a = jnp.pad(a, ((0, 0), (0, pad)))           # zeros; corrected below
        return a.reshape(N, Sp, 128)

    xp = prep(x)
    mp = prep(m)

    kernel = _make_focal_dice_kernel(ts=TS, gamma=gamma, binary_mask=binary_mask)

    n_trans = 3 if (binary_mask and gamma.is_integer()) else (4 if binary_mask else 6)
    bytes_in = N * HWp * (xp.dtype.itemsize + mp.dtype.itemsize)

    partials = pl.pallas_call(
        kernel,
        out_shape=jax.ShapeDtypeStruct((nsplit, N, 32, 128), jnp.float32),
        grid_spec=pltpu.PrefetchScalarGridSpec(
            num_scalar_prefetch=0,
            grid=(nsplit, N, Gs),
            in_specs=[
                pl.BlockSpec((1, TS, 128), lambda sp, b, g: (b, sp * Gs + g, 0)),
                pl.BlockSpec((1, TS, 128), lambda sp, b, g: (b, sp * Gs + g, 0)),
            ],
            out_specs=pl.BlockSpec((1, 1, 32, 128), lambda sp, b, g: (sp, b, 0, 0)),
        ),
        compiler_params=pltpu.CompilerParams(
            # Split/batch axes parallel (2 TCs on v7x); spatial axis carries the
            # resident per-(split,batch) accumulator block.
            dimension_semantics=("parallel", "parallel", "arbitrary"),
            vmem_limit_bytes=48 * 1024 * 1024,
        ),
        cost_estimate=pl.CostEstimate(
            flops=int(22 * N * HWp),
            transcendentals=int(n_trans * N * HWp),
            bytes_accessed=int(bytes_in + nsplit * N * 32 * 128 * 4),
        ),
    )(xp, mp)

    parts = jnp.sum(partials, axis=0)                    # merge spatial splits
    inter = jnp.sum(parts[:, 0:8, :], axis=(1, 2))
    den1 = jnp.sum(parts[:, 8:16, :], axis=(1, 2))
    den2 = jnp.sum(parts[:, 16:24, :], axis=(1, 2))
    fsum = jnp.sum(parts[:, 24:32, :], axis=(1, 2))

    if pad:
        # Zero-padded elements (x=0, m=0) contribute exact constants:
        #   sigmoid(0)^2 = 0.25 to den1;  2^-gamma * ln 2 to fsum; nothing else.
        den1 = den1 - 0.25 * pad
        fsum = fsum - pad * (0.5 ** gamma) * math.log(2.0)

    dice = 2.0 * (inter + 1.0) / (den1 + den2 + 1.0)
    dice_loss = 1.0 - jnp.sum(dice) / N
    focal = jnp.sum(fsum) / (N * HW)
    return alpha * focal - jnp.log(-dice_loss + 1.0)


def _focal_dice_ref(output, mask, gamma, alpha):
    """Pure-JAX faithful port of the PyTorch FocalDice module."""
    x = jnp.squeeze(output, axis=1).astype(jnp.float32)
    m = mask.astype(jnp.float32)
    # FocalLoss
    max_val = jnp.maximum(-x, 0.0)
    bce = x - x * m + max_val + jnp.log(jnp.exp(-max_val) + jnp.exp(-x - max_val))
    invprobs = jax.nn.log_sigmoid(-x * (m * 2.0 - 1.0))
    focal = jnp.mean(jnp.exp(invprobs * gamma) * bce)
    # DICELoss
    p = jax.nn.sigmoid(x)
    inter = jnp.sum(p * m, axis=(1, 2))
    den1 = jnp.sum(p * p, axis=(1, 2))
    den2 = jnp.sum(m * m, axis=(1, 2))
    dice = 2.0 * (inter + 1.0) / (den1 + den2 + 1.0)
    dice_loss = 1.0 - jnp.sum(dice) / dice.shape[0]
    return alpha * focal - jnp.log(-dice_loss + 1.0)


if __name__ == "__main__":
    key = jax.random.PRNGKey(0)
    k1, k2 = jax.random.split(key)

    # FocalLoss asserts output.squeeze(1).shape == mask.shape, so mask is (N,H,W).
    N, C, H, W = 2, 1, 16, 16
    gamma, alpha = 2.0, 0.5
    output = jax.random.normal(k1, (N, C, H, W), dtype=jnp.float32)
    mask = jax.random.bernoulli(k2, 0.5, (N, H, W)).astype(jnp.float32)

    loss = jax.block_until_ready(
        focal_dice_loss(output, mask, gamma=gamma, alpha=alpha))
    ref = jax.block_until_ready(_focal_dice_ref(output, mask, gamma, alpha))
    assert jnp.allclose(loss, ref, rtol=1e-4, atol=1e-4), (loss, ref)

    print("KERNEL_OK")
</pallas_src>

<mosaic_0001>
module attributes {stable_mosaic.version = 11 : i64} {
  func.func @kernel(%arg0: i32, %arg1: i32, %arg2: i32, %arg3: memref<1x8x128xf32, #tpu.memory_space<vmem>>, %arg4: memref<1x8x128xf32, #tpu.memory_space<vmem>>, %arg5: memref<1x1x32x128xf32, #tpu.memory_space<vmem>>) attributes {dimension_semantics = [#tpu.dimension_semantics<parallel>, #tpu.dimension_semantics<parallel>, #tpu.dimension_semantics<arbitrary>], iteration_bounds = array<i64: 1, 2, 1>, scalar_prefetch = 0 : i64, scratch_operands = 0 : i64, tpu.core_type = #tpu.core_type<tc>, window_params = [{transform_indices = @transform_0, window_bounds = array<i64: 1, 8, 128>}, {transform_indices = @transform_1, window_bounds = array<i64: 1, 8, 128>}, {transform_indices = @transform_2, window_bounds = array<i64: 1, 1, 32, 128>}]} {
    %c0_i32 = arith.constant 0 : i32
    %0 = arith.cmpi eq, %arg2, %c0_i32 : i32
    %1 = arith.extui %0 : i1 to i32
    %c0_i32_0 = arith.constant 0 : i32
    %2 = arith.cmpi ne, %1, %c0_i32_0 : i32
    scf.if %2 {
      %cst_21 = arith.constant 0.000000e+00 : f32
      %36 = vector.broadcast %cst_21 : f32 to vector<1x1x32x128xf32>
      %c0_22 = arith.constant 0 : index
      %c0_23 = arith.constant 0 : index
      %c0_24 = arith.constant 0 : index
      %c0_25 = arith.constant 0 : index
      %37 = vector.load %arg5[%c0_22, %c0_23, %c0_24, %c0_25] : memref<1x1x32x128xf32, #tpu.memory_space<vmem>>, vector<1x1x32x128xf32>
      tpu.vector_store %arg5[%c0_22, %c0_23, %c0_24, %c0_25], %36 {strides = array<i32>} : memref<1x1x32x128xf32, #tpu.memory_space<vmem>>, vector<1x1x32x128xf32>,
    } else {
    }
    %c0 = arith.constant 0 : index
    %c0_1 = arith.constant 0 : index
    %c0_2 = arith.constant 0 : index
    %3 = vector.load %arg3[%c0, %c0_1, %c0_2] : memref<1x8x128xf32, #tpu.memory_space<vmem>>, vector<1x8x128xf32>
    %c0_3 = arith.constant 0 : index
    %c0_4 = arith.constant 0 : index
    %c0_5 = arith.constant 0 : index
    %4 = vector.load %arg4[%c0_3, %c0_4, %c0_5] : memref<1x8x128xf32, #tpu.memory_space<vmem>>, vector<1x8x128xf32>
    %cst = arith.constant 0.000000e+00 : f32
    %5 = vector.broadcast %cst : f32 to vector<1x8x128xf32>
    %6 = arith.minimumf %3, %5 : vector<1x8x128xf32>
    %7 = math.absf %3 : vector<1x8x128xf32>
    %cst_6 = arith.constant 0.000000e+00 : f32
    %8 = vector.broadcast %cst_6 : f32 to vector<1x8x128xf32>
    %9 = arith.subf %8, %7 : vector<1x8x128xf32>
    %10 = math.exp %9 : vector<1x8x128xf32>
    %11 = math.log1p %10 : vector<1x8x128xf32>
    %12 = arith.subf %6, %11 : vector<1x8x128xf32>
    %13 = math.exp %12 : vector<1x8x128xf32>
    %cst_7 = arith.constant 1.000000e+00 : f32
    %14 = vector.broadcast %cst_7 : f32 to vector<1x8x128xf32>
    %15 = arith.subf %14, %4 : vector<1x8x128xf32>
    %16 = arith.mulf %3, %15 : vector<1x8x128xf32>
    %17 = arith.subf %16, %12 : vector<1x8x128xf32>
    %18 = arith.addf %4, %13 : vector<1x8x128xf32>
    %cst_8 = arith.constant 2.000000e+00 : f32
    %19 = vector.broadcast %cst_8 : f32 to vector<1x8x128xf32>
    %20 = arith.mulf %19, %4 : vector<1x8x128xf32>
    %21 = arith.mulf %20, %13 : vector<1x8x128xf32>
    %22 = arith.subf %18, %21 : vector<1x8x128xf32>
    %23 = arith.mulf %22, %22 : vector<1x8x128xf32>
    %24 = arith.mulf %23, %17 : vector<1x8x128xf32>
    %25 = arith.mulf %13, %4 : vector<1x8x128xf32>
    %cst_9 = arith.constant dense<0.000000e+00> : vector<8x128xf32>
    %26 = vector.multi_reduction <add>, %25, %cst_9 [0] : vector<1x8x128xf32> to vector<8x128xf32>
    %27 = arith.mulf %13, %13 : vector<1x8x128xf32>
    %cst_10 = arith.constant dense<0.000000e+00> : vector<8x128xf32>
    %28 = vector.multi_reduction <add>, %27, %cst_10 [0] : vector<1x8x128xf32> to vector<8x128xf32>
    %cst_11 = arith.constant dense<0.000000e+00> : vector<8x128xf32>
    %29 = vector.multi_reduction <add>, %4, %cst_11 [0] : vector<1x8x128xf32> to vector<8x128xf32>
    %cst_12 = arith.constant dense<0.000000e+00> : vector<8x128xf32>
    %30 = vector.multi_reduction <add>, %24, %cst_12 [0] : vector<1x8x128xf32> to vector<8x128xf32>
    %31 = tpu.concatenate %26, %28, %29, %30 in 0 : vector<8x128xf32>, vector<8x128xf32>, vector<8x128xf32>, vector<8x128xf32> -> vector<32x128xf32>
    %c0_13 = arith.constant 0 : index
    %c0_14 = arith.constant 0 : index
    %c0_15 = arith.constant 0 : index
    %c0_16 = arith.constant 0 : index
    %32 = vector.load %arg5[%c0_13, %c0_14, %c0_15, %c0_16] : memref<1x1x32x128xf32, #tpu.memory_space<vmem>>, vector<1x1x32x128xf32>
    %33 = vector.shape_cast %31 : vector<32x128xf32> to vector<1x1x32x128xf32>
    %34 = arith.addf %32, %33 : vector<1x1x32x128xf32>
    %c0_17 = arith.constant 0 : index
    %c0_18 = arith.constant 0 : index
    %c0_19 = arith.constant 0 : index
    %c0_20 = arith.constant 0 : index
    %35 = vector.load %arg5[%c0_17, %c0_18, %c0_19, %c0_20] : memref<1x1x32x128xf32, #tpu.memory_space<vmem>>, vector<1x1x32x128xf32>
    tpu.vector_store %arg5[%c0_17, %c0_18, %c0_19, %c0_20], %34 {strides = array<i32>} : memref<1x1x32x128xf32, #tpu.memory_space<vmem>>, vector<1x1x32x128xf32>,
    return
  }
  func.func @transform_0(%arg0: i32, %arg1: i32, %arg2: i32) -> (i32, i32, i32) {
    %c1_i32 = arith.constant 1 : i32
    %0 = arith.muli %arg0, %c1_i32 : i32
    %1 = arith.addi %0, %arg2 : i32
    %c0_i32 = arith.constant 0 : i32
    %c0_i32_0 = arith.constant 0 : i32
    return %arg1, %1, %c0_i32 : i32, i32, i32
  }
  func.func @transform_1(%arg0: i32, %arg1: i32, %arg2: i32) -> (i32, i32, i32) {
    %c1_i32 = arith.constant 1 : i32
    %0 = arith.muli %arg0, %c1_i32 : i32
    %1 = arith.addi %0, %arg2 : i32
    %c0_i32 = arith.constant 0 : i32
    %c0_i32_0 = arith.constant 0 : i32
    return %arg1, %1, %c0_i32 : i32, i32, i32
  }
  func.func @transform_2(%arg0: i32, %arg1: i32, %arg2: i32) -> (i32, i32, i32, i32) {
    %c0_i32 = arith.constant 0 : i32
    %c0_i32_0 = arith.constant 0 : i32
    %c0_i32_1 = arith.constant 0 : i32
    return %arg0, %arg1, %c0_i32, %c0_i32_0 : i32, i32, i32, i32
  }
}

</mosaic_0001>

<llo_original>
// kernel: tpu_custom_call.1
$region0: #{tpu_custom_call.1}
  #allocation0 [shape = 'u32[]', space=smem, size = 0x4, offset = 0x4, fixed_abs, tag = 'smem constant byte address 0x4 - core index']
  #allocation1 [shape = 'u32[144,128]{1,0:T(1,128)}', space=vmem, size = 0x12000, scoped, tag = 'internal scratch']
  %s0 = inlined_call_operand.hbm [shape: f32[2,8,128], index: 0, kind: input, shape index: {}]
  %s1 = inlined_call_operand.hbm [shape: f32[2,8,128], index: 1, kind: input, shape index: {}]
  %s2 = inlined_call_operand.hbm [shape: f32[1,2,32,128], index: 2, kind: output, shape index: {}]
  %s3 = sld [smem:[#allocation0]]
  $region53: #{tpu_custom_call.1} parent=0
    _
  %s5 = ssub.s32 1, %s3
  %s6 = scalar_select 0, %s5, %s3
  $region1: #{tpu_custom_call.1} parent=0
    #allocation2 [shape = 'u8[8192]{0}', space=vmem, size = 0x2000, scoped, tag = 'input window, operand 0']
    #allocation3 [shape = 's32[2]{0}', space=sflag, size = 0x8, scoped, tag = 'scoped memory for tpu_custom_call.1']
    #allocation4 [shape = 's32[2]{0}', space=sflag, size = 0x8, scoped, tag = 'scoped memory for tpu_custom_call.1']
    #allocation5 [shape = 'u8[8192]{0}', space=vmem, size = 0x2000, scoped, tag = 'input window, operand 1']
    #allocation6 [shape = 's32[2]{0}', space=sflag, size = 0x8, scoped, tag = 'scoped memory for tpu_custom_call.1']
    #allocation7 [shape = 'u8[32768]{0}', space=vmem, size = 0x8000, scoped, tag = 'output window, operand 0']
    %7 = vsyncpa [#allocation3], 0
    %s8 = scalar_lea.sflag [#allocation3], 1
    %9 = vsyncpa %s8, 0
    %10 = vsyncpa [#allocation6], 0
    %s11 = scalar_lea.sflag [#allocation6], 1
    %12 = vsyncpa %s11, 0
    %13 = vsyncpa [#allocation4], 0
    %s14 = scalar_lea.sflag [#allocation4], 1
    %15 = vsyncpa %s14, 0
    loop: start=0, step=1, limit=4
    $region2: #{tpu_custom_call.1} parent=1 // loop_pre_header
      _
    $region3: #{tpu_custom_call.1} parent=1 // loop_header
      %s17 = sphi 0, %s21
      %p18 = scmp.ge.s32.totalorder %s17, 4
      %s24 = sphi 0, %s43
      %s25 = sphi 0, %s39
      %s26 = sphi 0, %s35
      %s27 = sphi 0, %s24
      %s28 = sphi 0, %s25
      %s29 = sphi 0, %s26
      %s30 = sphi 0, %s27
      %s31 = sphi 0, %s28
      %s32 = sphi 0, %s29
      %s50 = sphi 0, %s52
      %s53 = sphi 0, %s50
      %s54 = sphi 0, %s53
      %s70 = sphi 0, %s54
      %s80 = sphi 0, %s82
      %s83 = sphi 0, %s80
      %s84 = sphi 0, %s83
      %s100 = sphi 0, %s84
      %s108 = sphi 0, %s110
      %s111 = sphi 0, %s108
      %s112 = sphi 0, %s111
      %s128 = sphi 0, %s112
    $region4: #{tpu_custom_call.1} parent=1 // loop_header_branch
      %20 = sbr.rel (%p18) target = $region8
    $region5: #{tpu_custom_call.1} parent=1 // loop_body
      %s22 = ssub.s32 %s17, 1
      %s23 = ssub.s32 %s17, 2
      %s33 = sadd.s32 1, %s26
      %p34 = scmp.ge.s32.totalorder %s33, 1
      %s35 = scalar_select %p34, 0, %s33
      %s36 = sadd.s32 1, %s25
      %s37 = scalar_select %p34, %s36, %s25
      %p38 = scmp.ge.s32.totalorder %s37, 2
      %s39 = scalar_select %p38, 0, %s37
      %s40 = sadd.s32 1, %s24
      %s41 = scalar_select %p38, %s40, %s24
      %p42 = scmp.ge.s32.totalorder %s41, 1
      %s43 = scalar_select %p42, 0, %s41
      %s44 = sadd.s32 %s24, %s26
      %s45 = sadd.s32 %s43, %s35
      %s46 = ssub.s32 %s25, %s39
      %s47 = ssub.s32 %s44, %s45
      %s48 = sor.u32 %s46, %s47
      %p49 = scmp.eq.s32.totalorder %s48, 0
      %s51 = sadd.s32 %s50, 1
      %s52 = scalar_select %p49, %s50, %s51
      %p55 = pneg %p49
      %p56 = scmp.eq.s32.totalorder %s17, 1
      %p57 = por %p55, %p56
      %p58 = scmp.ne.s32.totalorder %s50, %s53
      %p59 = scmp.eq.s32.totalorder %s17, 0
      %p60 = por %p58, %p59
      %p61 = scmp.ne.s32.totalorder %s50, %s53
      %p62 = scmp.eq.s32.totalorder %s22, 1
      %p63 = por %p61, %p62
      %p64 = scmp.ne.s32.totalorder %s53, %s54
      %p65 = scmp.eq.s32.totalorder %s22, 0
      %p66 = por %p64, %p65
      %p67 = scmp.ne.s32.totalorder %s53, %s54
      %p68 = scmp.eq.s32.totalorder %s23, 1
      %p69 = por %p67, %p68
      %p71 = scmp.ne.s32.totalorder %s54, %s70
      %p72 = scmp.eq.s32.totalorder %s23, 0
      %p73 = por %p71, %p72
      %s74 = sadd.s32 %s24, %s26
      %s75 = sadd.s32 %s43, %s35
      %s76 = ssub.s32 %s25, %s39
      %s77 = ssub.s32 %s74, %s75
      %s78 = sor.u32 %s76, %s77
      %p79 = scmp.eq.s32.totalorder %s78, 0
      %s81 = sadd.s32 %s80, 1
      %s82 = scalar_select %p79, %s80, %s81
      %p85 = pneg %p79
      %p86 = scmp.eq.s32.totalorder %s17, 1
      %p87 = por %p85, %p86
      %p88 = scmp.ne.s32.totalorder %s80, %s83
      %p89 = scmp.eq.s32.totalorder %s17, 0
      %p90 = por %p88, %p89
      %p91 = scmp.ne.s32.totalorder %s80, %s83
      %p92 = scmp.eq.s32.totalorder %s22, 1
      %p93 = por %p91, %p92
      %p94 = scmp.ne.s32.totalorder %s83, %s84
      %p95 = scmp.eq.s32.totalorder %s22, 0
      %p96 = por %p94, %p95
      %p97 = scmp.ne.s32.totalorder %s83, %s84
      %p98 = scmp.eq.s32.totalorder %s23, 1
      %p99 = por %p97, %p98
      %p101 = scmp.ne.s32.totalorder %s84, %s100
      %p102 = scmp.eq.s32.totalorder %s23, 0
      %p103 = por %p101, %p102
      %s104 = ssub.s32 %s24, %s43
      %s105 = ssub.s32 %s25, %s39
      %s106 = sor.u32 %s104, %s105
      %p107 = scmp.eq.s32.totalorder %s106, 0
      %s109 = sadd.s32 %s108, 1
      %s110 = scalar_select %p107, %s108, %s109
      %p113 = pneg %p107
      %p114 = scmp.eq.s32.totalorder %s17, 1
      %p115 = por %p113, %p114
      %p116 = scmp.ne.s32.totalorder %s108, %s111
      %p117 = scmp.eq.s32.totalorder %s17, 0
      %p118 = por %p116, %p117
      %p119 = scmp.ne.s32.totalorder %s108, %s111
      %p120 = scmp.eq.s32.totalorder %s22, 1
      %p121 = por %p119, %p120
      %p122 = scmp.ne.s32.totalorder %s111, %s112
      %p123 = scmp.eq.s32.totalorder %s22, 0
      %p124 = por %p122, %p123
      %p125 = scmp.ne.s32.totalorder %s111, %s112
      %p126 = scmp.eq.s32.totalorder %s23, 1
      %p127 = por %p125, %p126
      %p129 = scmp.ne.s32.totalorder %s112, %s128
      %p130 = scmp.eq.s32.totalorder %s23, 0
      %p131 = por %p129, %p130
      %p132 = scmp.le.s32.totalorder 1, %s17
      %p133 = scmp.lt.s32.totalorder %s17, 3
      %p134 = pnand %p132, %p133
      %p135 = pneg %p134
      // Predicated region
      $region9: #{tpu_custom_call.1} parent=5 // pred_check
        _
      $region10: #{tpu_custom_call.1} parent=5 // pred_check_branch
        %137 = sbr.rel (%p134) target = $region12
      $region11: #{tpu_custom_call.1} parent=5 // pred_region
        %s138 = ssub.s32 %s17, 1
      $region12: #{tpu_custom_call.1} parent=5 // pred_fallthru
        _
      %p139 = scmp.lt.s32.totalorder %s17, 2
      // Predicated region
      $region13: #{tpu_custom_call.1} parent=5 // pred_check
        %p140 = pneg %p139
      $region14: #{tpu_custom_call.1} parent=5 // pred_check_branch
        %142 = sbr.rel (%p140) target = $region16
      $region15: #{tpu_custom_call.1} parent=5 // pred_region
        // Predicated region
        $region17: #{tpu_custom_call.1} parent=15 // pred_check
          %p143 = pneg %p60
        $region18: #{tpu_custom_call.1} parent=15 // pred_check_branch
          %145 = sbr.rel (%p143) target = $region20
        $region19: #{tpu_custom_call.1} parent=15 // pred_region
          %s146 = sand.u32 %s50, 1
          %s147 = scalar_lea.sflag [#allocation3], %s146
          %s148 = sand.u32 %s50, 1
          %s149 = smul.addr %s148, 8
          %s150 = scalar_lea.vmem [#allocation2], %s149
          %s151 = sadd.s32 %s24, %s26
          %s153 = ssub.s32 128, 128
          %154 = vsyncadd %s147, %s153
          %s155 = sadd.s32 %s151, %s25
          %s156 = smul.addr %s155, 128
          %s157 = scalar_lea.hbm %s0, %s156
          %s159 = sshll.u32 %s150, 4
          %s160 = int_to_ptr.vmem [resolvable:$true] %s159
          %162 = dma.hbm_to_vmem [thread:$0]  %s157, 128, %s160, %s147
        $region20: #{tpu_custom_call.1} parent=15 // pred_fallthru
          _
        // Predicated region
        $region21: #{tpu_custom_call.1} parent=15 // pred_check
          %p163 = pneg %p90
        $region22: #{tpu_custom_call.1} parent=15 // pred_check_branch
          %165 = sbr.rel (%p163) target = $region24
        $region23: #{tpu_custom_call.1} parent=15 // pred_region
          %s166 = sand.u32 %s80, 1
          %s167 = scalar_lea.sflag [#allocation6], %s166
          %s168 = sand.u32 %s80, 1
          %s169 = smul.addr %s168, 8
          %s170 = scalar_lea.vmem [#allocation5], %s169
          %s171 = sadd.s32 %s24, %s26
          %s173 = ssub.s32 128, 128
          %174 = vsyncadd %s167, %s173
          %s175 = sadd.s32 %s171, %s25
          %s176 = smul.addr %s175, 128
          %s177 = scalar_lea.hbm %s1, %s176
          %s179 = sshll.u32 %s170, 4
          %s180 = int_to_ptr.vmem [resolvable:$true] %s179
          %182 = dma.hbm_to_vmem [thread:$0]  %s177, 128, %s180, %s167
        $region24: #{tpu_custom_call.1} parent=15 // pred_fallthru
          _
      $region16: #{tpu_custom_call.1} parent=5 // pred_fallthru
        _
      %p183 = scmp.le.s32.totalorder 1, %s17
      %p184 = scmp.lt.s32.totalorder %s17, 3
      %p185 = pnand %p183, %p184
      %p186 = pneg %p185
      // Predicated region
      $region25: #{tpu_custom_call.1} parent=5 // pred_check
        _
      $region26: #{tpu_custom_call.1} parent=5 // pred_check_branch
        %188 = sbr.rel (%p185) target = $region28
      $region27: #{tpu_custom_call.1} parent=5 // pred_region
        %s189 = ssub.s32 %s17, 1
        %s190 = sand.u32 %s53, 1
        %s191 = scalar_lea.sflag [#allocation3], %s190
        %s192 = sand.u32 %s53, 1
        %s193 = smul.addr %s192, 8
        %s194 = scalar_lea.vmem [#allocation2], %s193
        // Predicated region
        $region29: #{tpu_custom_call.1} parent=27 // pred_check
          %p195 = pneg %p66
        $region30: #{tpu_custom_call.1} parent=27 // pred_check_branch
          %197 = sbr.rel (%p195) target = $region32
        $region31: #{tpu_custom_call.1} parent=27 // pred_region
          %198 = dma.done %s191, 128
        $region32: #{tpu_custom_call.1} parent=27 // pred_fallthru
          _
        %s199 = sand.u32 %s83, 1
        %s200 = scalar_lea.sflag [#allocation6], %s199
        %s201 = sand.u32 %s83, 1
        %s202 = smul.addr %s201, 8
        %s203 = scalar_lea.vmem [#allocation5], %s202
        // Predicated region
        $region33: #{tpu_custom_call.1} parent=27 // pred_check
          %p204 = pneg %p96
        $region34: #{tpu_custom_call.1} parent=27 // pred_check_branch
          %206 = sbr.rel (%p204) target = $region36
        $region35: #{tpu_custom_call.1} parent=27 // pred_region
          %207 = dma.done %s200, 128
        $region36: #{tpu_custom_call.1} parent=27 // pred_fallthru
          _
        %s208 = sand.u32 %s53, 1
        %s209 = scalar_lea.sflag [#allocation3], %s208
        %s210 = sand.u32 %s53, 1
        %s211 = smul.addr %s210, 8
        %s212 = scalar_lea.vmem [#allocation2], %s211
        %p213 = pneg %p66
        %p214 = pneg %p63
        %s215 = sand.u32 %s83, 1
        %s216 = scalar_lea.sflag [#allocation6], %s215
        %s217 = sand.u32 %s83, 1
        %s218 = smul.addr %s217, 8
        %s219 = scalar_lea.vmem [#allocation5], %s218
        %p220 = pneg %p96
        %p221 = pneg %p93
        %p222 = pneg %p124
        %p223 = pneg %p121
        %s224 = sand.u32 %s111, 1
        %s225 = scalar_lea.sflag [#allocation4], %s224
        %s226 = sand.u32 %s111, 1
        %s227 = smul.addr %s226, 32
        %s228 = scalar_lea.vmem [#allocation7], %s227
        %s229 = sadd.s32 %s27, %s29
        %s230 = sadd.s32 %s27, %s29
        %p231 = scmp.eq.s32.totalorder %s29, 0
        // Predicated region
        $region37: #{tpu_custom_call.1} parent=27 // pred_check
          %p232 = pneg %p231
        $region38: #{tpu_custom_call.1} parent=27 // pred_check_branch
          %234 = sbr.rel (%p232) target = $region40
        $region39: #{tpu_custom_call.1} parent=27 // pred_region
          %235 = vst [vmem:[%s228] sm:$0xff] 0.0
          %236 = vst [vmem:[%s228 + $0x8] sm:$0xff] 0.0
          %237 = vst [vmem:[%s228 + $0x10] sm:$0xff] 0.0
          %238 = vst [vmem:[%s228 + $0x18] sm:$0xff] 0.0
        $region40: #{tpu_custom_call.1} parent=27 // pred_fallthru
          _
        %v239 = vld [vmem:[%s194] sm:$0xff]
        %v240 = vld [vmem:[%s203] sm:$0xff]
        %v241 = vmin.f32 %v239, 0.0
        %v242 = vand.u32 2147483647, %v239
        %v243 = vsub.f32 0.0, %v242
        %v244 = vmul.f32 %v243, 1.442695
        %v245 = vpow.pop %v244
        %v246 = vadd.f32 %v245, 1.0
        %v247 = vlog2.pop %v246
        %v248 = vmul.f32 %v247, 0.6931472
        %v249 = vmul.f32 -0.5, %v245
        %v250 = vadd.f32 %v249, 1.0
        %v251 = vmul.f32 %v250, %v245
        %v252 = vand.u32 2147483647, %v245
        %vm253 = vcmp.lt.f32.partialorder %v252, 0.0004427343
        %v254 = vsel %vm253, %v251, %v248
        %v255 = vsub.f32 %v241, %v254
        %v256 = vmul.f32 %v255, 1.442695
        %v257 = vpow.pop %v256
        %v258 = vsub.f32 1.0, %v240
        %v259 = vmul.f32 %v239, %v258
        %v260 = vsub.f32 %v259, %v255
        %v261 = vadd.f32 %v240, %v257
        %v262 = vmul.f32 %v240, 2.0
        %v263 = vmul.f32 %v262, %v257
        %v264 = vsub.f32 %v261, %v263
        %v265 = vmul.f32 %v264, %v264
        %v266 = vmul.f32 %v265, %v260
        %v267 = vmul.f32 %v257, %v240
        %v268 = vadd.f32 %v267, 0.0
        %v269 = vmul.f32 %v257, %v257
        %v270 = vadd.f32 %v269, 0.0
        %v271 = vadd.f32 %v240, 0.0
        %v272 = vadd.f32 %v266, 0.0
        %v273 = vld [vmem:[%s228] sm:$0xff]
        %v274 = vld [vmem:[%s228 + $0x8] sm:$0xff]
        %v275 = vld [vmem:[%s228 + $0x10] sm:$0xff]
        %v276 = vld [vmem:[%s228 + $0x18] sm:$0xff]
        %v277 = vadd.f32 %v273, %v268
        %v278 = vadd.f32 %v274, %v270
        %v279 = vadd.f32 %v275, %v271
        %v280 = vadd.f32 %v276, %v272
        %281 = vst [vmem:[%s228] sm:$0xff] %v277
        %282 = vst [vmem:[%s228 + $0x8] sm:$0xff] %v278
        %283 = vst [vmem:[%s228 + $0x10] sm:$0xff] %v279
        %284 = vst [vmem:[%s228 + $0x18] sm:$0xff] %v280
        %s285 = sand.u32 %s111, 1
        %s286 = scalar_lea.sflag [#allocation4], %s285
        %s287 = sand.u32 %s111, 1
        %s288 = smul.addr %s287, 32
        %s289 = scalar_lea.vmem [#allocation7], %s288
        // Predicated region
        $region41: #{tpu_custom_call.1} parent=27 // pred_check
          %p290 = pneg %p121
        $region42: #{tpu_custom_call.1} parent=27 // pred_check_branch
          %292 = sbr.rel (%p290) target = $region44
        $region43: #{tpu_custom_call.1} parent=27 // pred_region
          %s294 = ssub.s32 512, 512
          %295 = vsyncadd %s286, %s294
          %s296 = smul.addr %s28, 4
          %s297 = smul.addr %s27, 8
          %s298 = sadd.s32 %s296, %s297
          %s299 = smul.addr %s298, 128
          %s300 = scalar_lea.hbm %s2, %s299
          %s301 = sshll.u32 %s289, 4
          %s302 = int_to_ptr.vmem [resolvable:$true] %s301
          %307 = dma.vmem_to_hbm [thread:$0]  %s302, 512, %s300, %s286, 128, 128, 8
        $region44: #{tpu_custom_call.1} parent=27 // pred_fallthru
          _
      $region28: #{tpu_custom_call.1} parent=5 // pred_fallthru
        _
      %p308 = scmp.le.s32.totalorder 2, %s17
      // Predicated region
      $region45: #{tpu_custom_call.1} parent=5 // pred_check
        %p309 = pneg %p308
      $region46: #{tpu_custom_call.1} parent=5 // pred_check_branch
        %311 = sbr.rel (%p309) target = $region48
      $region47: #{tpu_custom_call.1} parent=5 // pred_region
        %s312 = ssub.s32 %s17, 2
        // Predicated region
        $region49: #{tpu_custom_call.1} parent=47 // pred_check
          %p313 = pneg %p127
        $region50: #{tpu_custom_call.1} parent=47 // pred_check_branch
          %315 = sbr.rel (%p313) target = $region52
        $region51: #{tpu_custom_call.1} parent=47 // pred_region
          %s316 = sand.u32 %s112, 1
          %s317 = scalar_lea.sflag [#allocation4], %s316
          %s318 = sand.u32 %s112, 1
          %s319 = smul.addr %s318, 32
          %s320 = scalar_lea.vmem [#allocation7], %s319
          %321 = dma.done %s317, 512
        $region52: #{tpu_custom_call.1} parent=47 // pred_fallthru
          _
      $region48: #{tpu_custom_call.1} parent=5 // pred_fallthru
        _
    $region6: #{tpu_custom_call.1} parent=1 // loop_footer
      %s21 = sadd.s32 1, %s17
    $region7: #{tpu_custom_call.1} parent=1 // loop_footer_branch
      %16 = sbr.rel target = $region3
    $region8: #{tpu_custom_call.1} parent=1 // loop_exit
      _
    %322 = vsyncpa [#allocation3], 1
    %s323 = scalar_lea.sflag [#allocation3], 1
    %324 = vsyncpa %s323, 1
    %325 = vsyncpa [#allocation6], 1
    %s326 = scalar_lea.sflag [#allocation6], 1
    %327 = vsyncpa %s326, 1
    %328 = vsyncpa [#allocation4], 1
    %s329 = scalar_lea.sflag [#allocation4], 1
    %330 = vsyncpa %s329, 1

</llo_original>
